<compile_context>
chip_gen: v6e
topology: v6e:2x2x1
jax: 0.10.0
libtpu: 0.0.40
codegen_flags: <defaults>
</compile_context>

<pallas_src>
import functools

import jax
import jax.numpy as jnp
from jax.experimental import pallas as pl
from jax.experimental.pallas import tpu as pltpu


def projection_head_kernel(x_ref, w1_ref, b1_ref, w2_ref, b2_ref, o_ref):
    # First linear: bf16 operands, f32 accumulation on the MXU.
    x = x_ref[...].astype(jnp.bfloat16)            # no-op when x is already bf16
    h = jnp.dot(x, w1_ref[...], preferred_element_type=jnp.float32)
    h = jnp.maximum(h + b1_ref[...], 0.0)          # bias + ReLU in f32
    # Second linear: bf16 activation back onto the MXU, f32 accumulation.
    o = jnp.dot(h.astype(jnp.bfloat16), w2_ref[...],
                preferred_element_type=jnp.float32)
    o_ref[...] = (o + b2_ref[...]).astype(o_ref.dtype)


def _round_up(v, m):
    return -(-v // m) * m


@functools.partial(jax.jit, static_argnames=("block_b", "out_dtype"))
def projection_head(x, w1, b1, w2, b2, *, block_b=512, out_dtype=None):
    B, D_in = x.shape
    H = w1.shape[1]
    D_out = w2.shape[1]
    assert w1.shape == (D_in, H)
    assert b1.shape == (1, H)
    assert w2.shape == (H, D_out)
    assert b2.shape == (1, D_out)
    if out_dtype is None:
        out_dtype = x.dtype                        # keep bf16 at the HBM boundary

    # Batch tile: multiple of 8 (sublane), no bigger than needed.
    tb = min(block_b, _round_up(B, 8))
    # Keep >= 2 batch tiles when the batch allows so ("parallel",) can shard
    # across v7x's two TensorCores; costs at most one extra ~0.35us grid step
    # on single-TC v5e/v6e.
    if B >= 16:
        tb = min(tb, _round_up(pl.cdiv(B, 2), 8))
    grid = (pl.cdiv(B, tb),)                       # ragged last block handled by Pallas

    flops = 2 * B * (D_in * H + H * D_out)
    bytes_accessed = (
        x.size * x.dtype.itemsize
        + B * D_out * jnp.dtype(out_dtype).itemsize
        + w1.size * w1.dtype.itemsize + w2.size * w2.dtype.itemsize
        + b1.size * b1.dtype.itemsize + b2.size * b2.dtype.itemsize)

    return pl.pallas_call(
        projection_head_kernel,
        out_shape=jax.ShapeDtypeStruct((B, D_out), out_dtype),
        grid=grid,
        in_specs=[
            # x: one batch tile per grid step (double-buffered by the pipeline).
            pl.BlockSpec((tb, D_in), lambda i: (i, 0)),
            # Weights / biases: constant index_map -> loaded once, VMEM-resident.
            pl.BlockSpec((D_in, H), lambda i: (0, 0)),
            pl.BlockSpec((1, H), lambda i: (0, 0)),
            pl.BlockSpec((H, D_out), lambda i: (0, 0)),
            pl.BlockSpec((1, D_out), lambda i: (0, 0)),
        ],
        out_specs=pl.BlockSpec((tb, D_out), lambda i: (i, 0)),
        compiler_params=pltpu.CompilerParams(
            dimension_semantics=("parallel",),     # shard batch tiles across TCs (v7x)
        ),
        cost_estimate=pl.CostEstimate(
            flops=flops, transcendentals=0, bytes_accessed=bytes_accessed),
    )(x, w1, b1, w2, b2)


def init_params(key, input_dim, hidden_dim, output_dim):
    # Deterministic synthetic init (Kaiming-uniform-ish, like nn.Linear defaults).
    # Weights stored bf16 (MXU operand dtype), biases f32 (added post-accumulate).
    k1, k2, k3, k4 = jax.random.split(key, 4)
    lim1 = 1.0 / jnp.sqrt(input_dim)
    lim2 = 1.0 / jnp.sqrt(hidden_dim)
    w1 = jax.random.uniform(k1, (input_dim, hidden_dim), jnp.float32,
                            -lim1, lim1).astype(jnp.bfloat16)
    b1 = jax.random.uniform(k2, (1, hidden_dim), jnp.float32, -lim1, lim1)
    w2 = jax.random.uniform(k3, (hidden_dim, output_dim), jnp.float32,
                            -lim2, lim2).astype(jnp.bfloat16)
    b2 = jax.random.uniform(k4, (1, output_dim), jnp.float32, -lim2, lim2)
    return w1, b1, w2, b2


def _reference(x, w1, b1, w2, b2):
    # Plain-JAX reference with the same precision policy
    # (bf16 MXU operands, f32 accumulation, f32 bias adds).
    h = jnp.dot(x.astype(jnp.bfloat16), w1, preferred_element_type=jnp.float32) + b1
    h = jnp.maximum(h, 0.0)
    return jnp.dot(h.astype(jnp.bfloat16), w2, preferred_element_type=jnp.float32) + b2


if __name__ == "__main__":
    # Small-but-representative shapes: input_dim=256, hidden_dim=512 (module
    # default), projection_dim=128 (Config default).
    D_IN, HID, D_OUT = 256, 512, 128

    key = jax.random.PRNGKey(0)
    kx, kp = jax.random.split(key)
    w1, b1, w2, b2 = init_params(kp, D_IN, HID, D_OUT)

    # Case 1: batch divisible by the tile (B=64 -> tb=32, grid=(2,)).
    B = 64
    x = jax.random.normal(kx, (B, D_IN), jnp.float32).astype(jnp.bfloat16)
    out = jax.block_until_ready(projection_head(x, w1, b1, w2, b2))
    assert out.shape == (B, D_OUT)
    assert out.dtype == jnp.bfloat16
    ref = _reference(x, w1, b1, w2, b2)
    assert jnp.allclose(out.astype(jnp.float32), ref, atol=2e-2, rtol=2e-2), (
        float(jnp.max(jnp.abs(out.astype(jnp.float32) - ref))))

    # Case 2: ragged batch (B=52 -> tb=32, grid=(2,), last block partial).
    # OOB rows of the last block are never written back; compute is row-wise.
    B2 = 52
    x2 = jax.random.normal(kx, (B2, D_IN), jnp.float32).astype(jnp.bfloat16)
    out2 = jax.block_until_ready(projection_head(x2, w1, b1, w2, b2))
    assert out2.shape == (B2, D_OUT)
    ref2 = _reference(x2, w1, b1, w2, b2)
    assert jnp.allclose(out2.astype(jnp.float32), ref2, atol=2e-2, rtol=2e-2), (
        float(jnp.max(jnp.abs(out2.astype(jnp.float32) - ref2))))

    print("KERNEL_OK")
</pallas_src>

<mosaic_0001>
module attributes {stable_mosaic.version = 11 : i64} {
  func.func @projection_head_kernel(%arg0: i32, %arg1: memref<32x256xbf16, #tpu.memory_space<vmem>>, %arg2: memref<256x512xbf16, #tpu.memory_space<vmem>>, %arg3: memref<1x512xf32, #tpu.memory_space<vmem>>, %arg4: memref<512x128xbf16, #tpu.memory_space<vmem>>, %arg5: memref<1x128xf32, #tpu.memory_space<vmem>>, %arg6: memref<32x128xbf16, #tpu.memory_space<vmem>>) attributes {dimension_semantics = [#tpu.dimension_semantics<parallel>], iteration_bounds = array<i64: 2>, scalar_prefetch = 0 : i64, scratch_operands = 0 : i64, tpu.core_type = #tpu.core_type<tc>, window_params = [{transform_indices = @transform_0, window_bounds = array<i64: 32, 256>}, {pipeline_mode = #tpu.pipeline_mode<synchronous>, transform_indices = @transform_1, window_bounds = array<i64: 256, 512>}, {pipeline_mode = #tpu.pipeline_mode<synchronous>, transform_indices = @transform_2, window_bounds = array<i64: 1, 512>}, {pipeline_mode = #tpu.pipeline_mode<synchronous>, transform_indices = @transform_3, window_bounds = array<i64: 512, 128>}, {pipeline_mode = #tpu.pipeline_mode<synchronous>, transform_indices = @transform_4, window_bounds = array<i64: 1, 128>}, {transform_indices = @transform_5, window_bounds = array<i64: 32, 128>}]} {
    %c0 = arith.constant 0 : index
    %c0_0 = arith.constant 0 : index
    %0 = vector.load %arg1[%c0, %c0_0] : memref<32x256xbf16, #tpu.memory_space<vmem>>, vector<32x256xbf16>
    %c0_1 = arith.constant 0 : index
    %c0_2 = arith.constant 0 : index
    %1 = vector.load %arg2[%c0_1, %c0_2] : memref<256x512xbf16, #tpu.memory_space<vmem>>, vector<256x512xbf16>
    %cst = arith.constant dense<0.000000e+00> : vector<32x512xf32>
    %2 = tpu.matmul %0, %1, %cst {dimension_numbers = #tpu.dot_dimension_numbers<[1], [0], [0], [1], [0, 0, 1, 1], [], []>} : vector<32x256xbf16>, vector<256x512xbf16>, vector<32x512xf32> -> vector<32x512xf32>
    %c0_3 = arith.constant 0 : index
    %c0_4 = arith.constant 0 : index
    %3 = vector.load %arg3[%c0_3, %c0_4] : memref<1x512xf32, #tpu.memory_space<vmem>>, vector<1x512xf32>
    %4 = vector.broadcast %3 : vector<1x512xf32> to vector<32x512xf32>
    %5 = arith.addf %2, %4 : vector<32x512xf32>
    %cst_5 = arith.constant 0.000000e+00 : f32
    %6 = vector.broadcast %cst_5 : f32 to vector<32x512xf32>
    %7 = arith.maximumf %5, %6 : vector<32x512xf32>
    %8 = arith.truncf %7 : vector<32x512xf32> to vector<32x512xbf16>
    %c0_6 = arith.constant 0 : index
    %c0_7 = arith.constant 0 : index
    %9 = vector.load %arg4[%c0_6, %c0_7] : memref<512x128xbf16, #tpu.memory_space<vmem>>, vector<512x128xbf16>
    %cst_8 = arith.constant dense<0.000000e+00> : vector<32x128xf32>
    %10 = tpu.matmul %8, %9, %cst_8 {dimension_numbers = #tpu.dot_dimension_numbers<[1], [0], [0], [1], [0, 0, 1, 1], [], []>} : vector<32x512xbf16>, vector<512x128xbf16>, vector<32x128xf32> -> vector<32x128xf32>
    %c0_9 = arith.constant 0 : index
    %c0_10 = arith.constant 0 : index
    %11 = vector.load %arg5[%c0_9, %c0_10] : memref<1x128xf32, #tpu.memory_space<vmem>>, vector<1x128xf32>
    %12 = vector.broadcast %11 : vector<1x128xf32> to vector<32x128xf32>
    %13 = arith.addf %10, %12 : vector<32x128xf32>
    %14 = arith.truncf %13 : vector<32x128xf32> to vector<32x128xbf16>
    %c0_11 = arith.constant 0 : index
    %c0_12 = arith.constant 0 : index
    %15 = vector.load %arg6[%c0_11, %c0_12] : memref<32x128xbf16, #tpu.memory_space<vmem>>, vector<32x128xbf16>
    tpu.vector_store %arg6[%c0_11, %c0_12], %14 {strides = array<i32>} : memref<32x128xbf16, #tpu.memory_space<vmem>>, vector<32x128xbf16>,
    return
  }
  func.func @transform_0(%arg0: i32) -> (i32, i32) {
    %c0_i32 = arith.constant 0 : i32
    %c0_i32_0 = arith.constant 0 : i32
    return %arg0, %c0_i32 : i32, i32
  }
  func.func @transform_1(%arg0: i32) -> (i32, i32) {
    %c0_i32 = arith.constant 0 : i32
    %c0_i32_0 = arith.constant 0 : i32
    %c0_i32_1 = arith.constant 0 : i32
    return %c0_i32, %c0_i32_0 : i32, i32
  }
  func.func @transform_2(%arg0: i32) -> (i32, i32) {
    %c0_i32 = arith.constant 0 : i32
    %c0_i32_0 = arith.constant 0 : i32
    %c0_i32_1 = arith.constant 0 : i32
    return %c0_i32, %c0_i32_0 : i32, i32
  }
  func.func @transform_3(%arg0: i32) -> (i32, i32) {
    %c0_i32 = arith.constant 0 : i32
    %c0_i32_0 = arith.constant 0 : i32
    %c0_i32_1 = arith.constant 0 : i32
    return %c0_i32, %c0_i32_0 : i32, i32
  }
  func.func @transform_4(%arg0: i32) -> (i32, i32) {
    %c0_i32 = arith.constant 0 : i32
    %c0_i32_0 = arith.constant 0 : i32
    %c0_i32_1 = arith.constant 0 : i32
    return %c0_i32, %c0_i32_0 : i32, i32
  }
  func.func @transform_5(%arg0: i32) -> (i32, i32) {
    %c0_i32 = arith.constant 0 : i32
    %c0_i32_0 = arith.constant 0 : i32
    return %arg0, %c0_i32 : i32, i32
  }
}

</mosaic_0001>

<llo_original>
// kernel: projection_head.1
$region0: #{projection_head.1}
  #allocation0 [shape = 'u32[]', space=smem, size = 0x4, offset = 0x4, fixed_abs, tag = 'smem constant byte address 0x4 - core index']
  #allocation1 [shape = 'u32[144,128]{1,0:T(1,128)}', space=vmem, size = 0x12000, scoped, tag = 'internal scratch']
  %s0 = inlined_call_operand.hbm [shape: bf16[64,256], index: 0, kind: input, shape index: {}]
  %s1 = inlined_call_operand.hbm [shape: bf16[256,512], index: 1, kind: input, shape index: {}]
  %s2 = inlined_call_operand.hbm [shape: f32[1,512], index: 2, kind: input, shape index: {}]
  %s3 = inlined_call_operand.hbm [shape: bf16[512,128], index: 3, kind: input, shape index: {}]
  %s4 = inlined_call_operand.vmem [shape: f32[1,128], index: 4, kind: input, shape index: {}]
  %s5 = inlined_call_operand.hbm [shape: bf16[64,128], index: 5, kind: output, shape index: {}]
  %s6 = sld [smem:[#allocation0]]
  $region69: #{projection_head.1} parent=0
    _
  %s8 = ssub.s32 1, %s6
  %s9 = scalar_select 0, %s8, %s6
  $region1: #{projection_head.1} parent=0
    #allocation2 [shape = 'u8[32768]{0}', space=vmem, size = 0x8000, scoped, tag = 'input window, operand 0']
    #allocation3 [shape = 's32[2]{0}', space=sflag, size = 0x8, scoped, tag = 'scoped memory for projection_head.1']
    #allocation4 [shape = 's32[2]{0}', space=sflag, size = 0x8, scoped, tag = 'scoped memory for projection_head.1']
    #allocation5 [shape = 'u8[262144]{0}', space=vmem, size = 0x40000, scoped, tag = 'input window, operand 1, single buffered']
    #allocation6 [shape = 's32[1]{0}', space=sflag, size = 0x4, scoped, tag = 'scoped memory for projection_head.1']
    #allocation7 [shape = 'u8[2048]{0}', space=vmem, size = 0x800, scoped, tag = 'input window, operand 2, single buffered']
    #allocation8 [shape = 'u8[131072]{0}', space=vmem, size = 0x20000, scoped, tag = 'input window, operand 3, single buffered']
    #allocation9 [shape = 's32[1]{0}', space=sflag, size = 0x4, scoped, tag = 'scoped memory for projection_head.1']
    #allocation10 [shape = 'u8[16384]{0}', space=vmem, size = 0x4000, scoped, tag = 'output window, operand 0']
    %10 = vsyncpa [#allocation3], 0
    %s11 = scalar_lea.sflag [#allocation3], 1
    %12 = vsyncpa %s11, 0
    %13 = vsyncpa [#allocation6], 0
    %14 = vsyncpa [#allocation9], 0
    %15 = vsyncpa [#allocation4], 0
    %s16 = scalar_lea.sflag [#allocation4], 1
    %17 = vsyncpa %s16, 0
    loop: start=0, step=1, limit=4
    $region2: #{projection_head.1} parent=1 // loop_pre_header
      _
    $region3: #{projection_head.1} parent=1 // loop_header
      %s19 = sphi 0, %s23
      %p20 = scmp.ge.s32.totalorder %s19, 4
      %s29 = sphi 0, %s31
      %s32 = sphi 0, %s29
      %s33 = sphi 0, %s32
      %s49 = sphi 0, %s33
      %s53 = sphi 0, %s53
      %s55 = sphi 0, %s53
      %s56 = sphi 0, %s55
      %s70 = sphi 0, %s56
      %s74 = sphi 0, %s74
      %s76 = sphi 0, %s74
      %s77 = sphi 0, %s76
      %s91 = sphi 0, %s77
      %s95 = sphi 0, %s95
      %s97 = sphi 0, %s95
      %s98 = sphi 0, %s97
      %s112 = sphi 0, %s98
      %s116 = sphi 0, %s116
      %s118 = sphi 0, %s116
      %s119 = sphi 0, %s118
      %s133 = sphi 0, %s119
      %s139 = sphi 0, %s141
      %s142 = sphi 0, %s139
      %s143 = sphi 0, %s142
      %s159 = sphi 0, %s143
    $region4: #{projection_head.1} parent=1 // loop_header_branch
      %22 = sbr.rel (%p20) target = $region8
    $region5: #{projection_head.1} parent=1 // loop_body
      %s24 = ssub.s32 %s19, 1
      %s25 = ssub.s32 %s19, 2
      %s26 = sadd.s32 %s19, 1
      %s27 = ssub.s32 %s19, %s26
      %p28 = scmp.eq.s32.totalorder %s27, 0
      %s30 = sadd.s32 %s29, 1
      %s31 = scalar_select %p28, %s29, %s30
      %p34 = pneg %p28
      %p35 = scmp.eq.s32.totalorder %s19, 1
      %p36 = por %p34, %p35
      %p37 = scmp.ne.s32.totalorder %s29, %s32
      %p38 = scmp.eq.s32.totalorder %s19, 0
      %p39 = por %p37, %p38
      %p40 = scmp.ne.s32.totalorder %s29, %s32
      %p41 = scmp.eq.s32.totalorder %s24, 1
      %p42 = por %p40, %p41
      %p43 = scmp.ne.s32.totalorder %s32, %s33
      %p44 = scmp.eq.s32.totalorder %s24, 0
      %p45 = por %p43, %p44
      %p46 = scmp.ne.s32.totalorder %s32, %s33
      %p47 = scmp.eq.s32.totalorder %s25, 1
      %p48 = por %p46, %p47
      %p50 = scmp.ne.s32.totalorder %s33, %s49
      %p51 = scmp.eq.s32.totalorder %s25, 0
      %p52 = por %p50, %p51
      %s54 = sadd.s32 %s53, 1
      %p57 = scmp.eq.s32.totalorder %s19, 1
      %p58 = scmp.ne.s32.totalorder %s53, %s55
      %p59 = scmp.eq.s32.totalorder %s19, 0
      %p60 = por %p58, %p59
      %p61 = scmp.ne.s32.totalorder %s53, %s55
      %p62 = scmp.eq.s32.totalorder %s24, 1
      %p63 = por %p61, %p62
      %p64 = scmp.ne.s32.totalorder %s55, %s56
      %p65 = scmp.eq.s32.totalorder %s24, 0
      %p66 = por %p64, %p65
      %p67 = scmp.ne.s32.totalorder %s55, %s56
      %p68 = scmp.eq.s32.totalorder %s25, 1
      %p69 = por %p67, %p68
      %p71 = scmp.ne.s32.totalorder %s56, %s70
      %p72 = scmp.eq.s32.totalorder %s25, 0
      %p73 = por %p71, %p72
      %s75 = sadd.s32 %s74, 1
      %p78 = scmp.eq.s32.totalorder %s19, 1
      %p79 = scmp.ne.s32.totalorder %s74, %s76
      %p80 = scmp.eq.s32.totalorder %s19, 0
      %p81 = por %p79, %p80
      %p82 = scmp.ne.s32.totalorder %s74, %s76
      %p83 = scmp.eq.s32.totalorder %s24, 1
      %p84 = por %p82, %p83
      %p85 = scmp.ne.s32.totalorder %s76, %s77
      %p86 = scmp.eq.s32.totalorder %s24, 0
      %p87 = por %p85, %p86
      %p88 = scmp.ne.s32.totalorder %s76, %s77
      %p89 = scmp.eq.s32.totalorder %s25, 1
      %p90 = por %p88, %p89
      %p92 = scmp.ne.s32.totalorder %s77, %s91
      %p93 = scmp.eq.s32.totalorder %s25, 0
      %p94 = por %p92, %p93
      %s96 = sadd.s32 %s95, 1
      %p99 = scmp.eq.s32.totalorder %s19, 1
      %p100 = scmp.ne.s32.totalorder %s95, %s97
      %p101 = scmp.eq.s32.totalorder %s19, 0
      %p102 = por %p100, %p101
      %p103 = scmp.ne.s32.totalorder %s95, %s97
      %p104 = scmp.eq.s32.totalorder %s24, 1
      %p105 = por %p103, %p104
      %p106 = scmp.ne.s32.totalorder %s97, %s98
      %p107 = scmp.eq.s32.totalorder %s24, 0
      %p108 = por %p106, %p107
      %p109 = scmp.ne.s32.totalorder %s97, %s98
      %p110 = scmp.eq.s32.totalorder %s25, 1
      %p111 = por %p109, %p110
      %p113 = scmp.ne.s32.totalorder %s98, %s112
      %p114 = scmp.eq.s32.totalorder %s25, 0
      %p115 = por %p113, %p114
      %s117 = sadd.s32 %s116, 1
      %p120 = scmp.eq.s32.totalorder %s19, 1
      %p121 = scmp.ne.s32.totalorder %s116, %s118
      %p122 = scmp.eq.s32.totalorder %s19, 0
      %p123 = por %p121, %p122
      %p124 = scmp.ne.s32.totalorder %s116, %s118
      %p125 = scmp.eq.s32.totalorder %s24, 1
      %p126 = por %p124, %p125
      %p127 = scmp.ne.s32.totalorder %s118, %s119
      %p128 = scmp.eq.s32.totalorder %s24, 0
      %p129 = por %p127, %p128
      %p130 = scmp.ne.s32.totalorder %s118, %s119
      %p131 = scmp.eq.s32.totalorder %s25, 1
      %p132 = por %p130, %p131
      %p134 = scmp.ne.s32.totalorder %s119, %s133
      %p135 = scmp.eq.s32.totalorder %s25, 0
      %p136 = por %p134, %p135
      %s137 = ssub.s32 %s19, %s26
      %p138 = scmp.eq.s32.totalorder %s137, 0
      %s140 = sadd.s32 %s139, 1
      %s141 = scalar_select %p138, %s139, %s140
      %p144 = pneg %p138
      %p145 = scmp.eq.s32.totalorder %s19, 1
      %p146 = por %p144, %p145
      %p147 = scmp.ne.s32.totalorder %s139, %s142
      %p148 = scmp.eq.s32.totalorder %s19, 0
      %p149 = por %p147, %p148
      %p150 = scmp.ne.s32.totalorder %s139, %s142
      %p151 = scmp.eq.s32.totalorder %s24, 1
      %p152 = por %p150, %p151
      %p153 = scmp.ne.s32.totalorder %s142, %s143
      %p154 = scmp.eq.s32.totalorder %s24, 0
      %p155 = por %p153, %p154
      %p156 = scmp.ne.s32.totalorder %s142, %s143
      %p157 = scmp.eq.s32.totalorder %s25, 1
      %p158 = por %p156, %p157
      %p160 = scmp.ne.s32.totalorder %s143, %s159
      %p161 = scmp.eq.s32.totalorder %s25, 0
      %p162 = por %p160, %p161
      %p163 = scmp.le.s32.totalorder 1, %s19
      %p164 = scmp.lt.s32.totalorder %s19, 3
      %p165 = pnand %p163, %p164
      %p166 = pneg %p165
      // Predicated region
      $region9: #{projection_head.1} parent=5 // pred_check
        _
      $region10: #{projection_head.1} parent=5 // pred_check_branch
        %168 = sbr.rel (%p165) target = $region12
      $region11: #{projection_head.1} parent=5 // pred_region
        %s169 = ssub.s32 %s19, 1
        // Predicated region
        $region13: #{projection_head.1} parent=11 // pred_check
          %p170 = pneg %p66
        $region14: #{projection_head.1} parent=11 // pred_check_branch
          %172 = sbr.rel (%p170) target = $region16
        $region15: #{projection_head.1} parent=11 // pred_region
          %s174 = ssub.s32 8192, 8192
          %175 = vsyncadd [#allocation6], %s174
          %s176 = sshll.u32 [#allocation5], 4
          %s177 = int_to_ptr.vmem [resolvable:$true] %s176
          %182 = dma.hbm_to_vmem [thread:$0]  %s1, 8192, %s177, [#allocation6], 256, 256, 16
        $region16: #{projection_head.1} parent=11 // pred_fallthru
          _
        // Predicated region
        $region17: #{projection_head.1} parent=11 // pred_check
          %p183 = pneg %p87
        $region18: #{projection_head.1} parent=11 // pred_check_branch
          %185 = sbr.rel (%p183) target = $region20
        $region19: #{projection_head.1} parent=11 // pred_region
          %s187 = ssub.s32 64, 64
          %188 = vsyncadd [#allocation6], %s187
          %s190 = sshll.u32 [#allocation7], 4
          %s191 = int_to_ptr.vmem [resolvable:$true] %s190
          %193 = dma.hbm_to_vmem [thread:$0]  %s2, 64, %s191, [#allocation6]
        $region20: #{projection_head.1} parent=11 // pred_fallthru
          _
        // Predicated region
        $region21: #{projection_head.1} parent=11 // pred_check
          %p194 = pneg %p108
        $region22: #{projection_head.1} parent=11 // pred_check_branch
          %196 = sbr.rel (%p194) target = $region24
        $region23: #{projection_head.1} parent=11 // pred_region
          %s198 = ssub.s32 4096, 4096
          %199 = vsyncadd [#allocation9], %s198
          %s200 = sshll.u32 [#allocation8], 4
          %s201 = int_to_ptr.vmem [resolvable:$true] %s200
          %206 = dma.hbm_to_vmem [thread:$0]  %s3, 4096, %s201, [#allocation9], 64, 64, 4
        $region24: #{projection_head.1} parent=11 // pred_fallthru
          _
        // Predicated region
        $region25: #{projection_head.1} parent=11 // pred_check
          %p207 = pneg %p129
        $region26: #{projection_head.1} parent=11 // pred_check_branch
          %209 = sbr.rel (%p207) target = $region28
        $region27: #{projection_head.1} parent=11 // pred_region
          _
        $region28: #{projection_head.1} parent=11 // pred_fallthru
          _
      $region12: #{projection_head.1} parent=5 // pred_fallthru
        _
      %p210 = scmp.lt.s32.totalorder %s19, 2
      // Predicated region
      $region29: #{projection_head.1} parent=5 // pred_check
        %p211 = pneg %p210
      $region30: #{projection_head.1} parent=5 // pred_check_branch
        %213 = sbr.rel (%p211) target = $region32
      $region31: #{projection_head.1} parent=5 // pred_region
        // Predicated region
        $region33: #{projection_head.1} parent=31 // pred_check
          %p214 = pneg %p39
        $region34: #{projection_head.1} parent=31 // pred_check_branch
          %216 = sbr.rel (%p214) target = $region36
        $region35: #{projection_head.1} parent=31 // pred_region
          %s217 = sand.u32 %s29, 1
          %s218 = scalar_lea.sflag [#allocation3], %s217
          %s219 = sand.u32 %s29, 1
          %s220 = smul.addr %s219, 32
          %s221 = scalar_lea.vmem [#allocation2], %s220
          %s222 = smul.u32 4, %s19
          %s224 = ssub.s32 512, 512
          %225 = vsyncadd %s218, %s224
          %s226 = smul.addr %s222, 2
          %s227 = smul.addr %s226, 64
          %s228 = scalar_lea.hbm %s0, %s227
          %s229 = sshll.u32 %s221, 4
          %s230 = int_to_ptr.vmem [resolvable:$true] %s229
          %235 = dma.hbm_to_vmem [thread:$0]  %s228, 512, %s230, %s218, 128, 128, 8
        $region36: #{projection_head.1} parent=31 // pred_fallthru
          _
      $region32: #{projection_head.1} parent=5 // pred_fallthru
        _
      %p236 = scmp.le.s32.totalorder 1, %s19
      %p237 = scmp.lt.s32.totalorder %s19, 3
      %p238 = pnand %p236, %p237
      %p239 = pneg %p238
      // Predicated region
      $region37: #{projection_head.1} parent=5 // pred_check
        _
      $region38: #{projection_head.1} parent=5 // pred_check_branch
        %241 = sbr.rel (%p238) target = $region40
      $region39: #{projection_head.1} parent=5 // pred_region
        %s242 = ssub.s32 %s19, 1
        %s243 = sand.u32 %s32, 1
        %s244 = scalar_lea.sflag [#allocation3], %s243
        %s245 = sand.u32 %s32, 1
        %s246 = smul.addr %s245, 32
        %s247 = scalar_lea.vmem [#allocation2], %s246
        // Predicated region
        $region41: #{projection_head.1} parent=39 // pred_check
          %p248 = pneg %p45
        $region42: #{projection_head.1} parent=39 // pred_check_branch
          %250 = sbr.rel (%p248) target = $region44
        $region43: #{projection_head.1} parent=39 // pred_region
          %251 = dma.done %s244, 512
        $region44: #{projection_head.1} parent=39 // pred_fallthru
          _
        // Predicated region
        $region45: #{projection_head.1} parent=39 // pred_check
          %p252 = pneg %p66
        $region46: #{projection_head.1} parent=39 // pred_check_branch
          %254 = sbr.rel (%p252) target = $region48
        $region47: #{projection_head.1} parent=39 // pred_region
          %255 = dma.done [#allocation6], 8192
        $region48: #{projection_head.1} parent=39 // pred_fallthru
          _
        // Predicated region
        $region49: #{projection_head.1} parent=39 // pred_check
          %p256 = pneg %p87
        $region50: #{projection_head.1} parent=39 // pred_check_branch
          %258 = sbr.rel (%p256) target = $region52
        $region51: #{projection_head.1} parent=39 // pred_region
          %259 = dma.done [#allocation6], 64
        $region52: #{projection_head.1} parent=39 // pred_fallthru
          _
        // Predicated region
        $region53: #{projection_head.1} parent=39 // pred_check
          %p260 = pneg %p108
        $region54: #{projection_head.1} parent=39 // pred_check_branch
          %262 = sbr.rel (%p260) target = $region56
        $region55: #{projection_head.1} parent=39 // pred_region
          %263 = dma.done [#allocation9], 4096
        $region56: #{projection_head.1} parent=39 // pred_fallthru
          _
        %s264 = sand.u32 %s32, 1
        %s265 = scalar_lea.sflag [#allocation3], %s264
        %s266 = sand.u32 %s32, 1
        %s267 = smul.addr %s266, 32
        %s268 = scalar_lea.vmem [#allocation2], %s267
        %p269 = pneg %p45
        %p270 = pneg %p42
        %p271 = pneg %p66
        %p272 = pneg %p63
        %p273 = pneg %p87
        %p274 = pneg %p84
        %p275 = pneg %p108
        %p276 = pneg %p105
        %p277 = pneg %p129
        %p278 = pneg %p126
        %p279 = pneg %p155
        %p280 = pneg %p152
        %s281 = sand.u32 %s142, 1
        %s282 = scalar_lea.sflag [#allocation4], %s281
        %s283 = sand.u32 %s142, 1
        %s284 = smul.addr %s283, 16
        %s285 = scalar_lea.vmem [#allocation10], %s284
        %s286 = smul.u32 4, %s24
        %s287 = smul.u32 4, %s24
        %v289 = vld [vmem:[%s247] sm:$0xff]
        %v290 = vld [vmem:[%s247 + $0x8] sm:$0xff]
        %v291 = vld [vmem:[%s247 + $0x10] sm:$0xff]
        %v292 = vld [vmem:[%s247 + $0x18] sm:$0xff]
        %v293 = vld [vmem:[#allocation5] sm:$0xff]
        %v294 = vld [vmem:[#allocation5 + $0x8] sm:$0xff]
        %v295 = vld [vmem:[#allocation5 + $0x10] sm:$0xff]
        %v296 = vld [vmem:[#allocation5 + $0x18] sm:$0xff]
        %v297 = vld [vmem:[#allocation5 + $0x20] sm:$0xff]
        %v298 = vld [vmem:[#allocation5 + $0x28] sm:$0xff]
        %v299 = vld [vmem:[#allocation5 + $0x30] sm:$0xff]
        %v300 = vld [vmem:[#allocation5 + $0x38] sm:$0xff]
        %v301 = vld [vmem:[#allocation5 + $0x40] sm:$0xff]
        %v302 = vld [vmem:[#allocation5 + $0x48] sm:$0xff]
        %v303 = vld [vmem:[#allocation5 + $0x50] sm:$0xff]
        %v304 = vld [vmem:[#allocation5 + $0x58] sm:$0xff]
        %v305 = vld [vmem:[#allocation5 + $0x60] sm:$0xff]
        %v306 = vld [vmem:[#allocation5 + $0x68] sm:$0xff]
        %v307 = vld [vmem:[#allocation5 + $0x70] sm:$0xff]
        %v308 = vld [vmem:[#allocation5 + $0x78] sm:$0xff]
        %v309 = vld [vmem:[#allocation5 + $0x80] sm:$0xff]
        %v310 = vld [vmem:[#allocation5 + $0x88] sm:$0xff]
        %v311 = vld [vmem:[#allocation5 + $0x90] sm:$0xff]
        %v312 = vld [vmem:[#allocation5 + $0x98] sm:$0xff]
        %v313 = vld [vmem:[#allocation5 + $0xa0] sm:$0xff]
        %v314 = vld [vmem:[#allocation5 + $0xa8] sm:$0xff]
        %v315 = vld [vmem:[#allocation5 + $0xb0] sm:$0xff]
        %v316 = vld [vmem:[#allocation5 + $0xb8] sm:$0xff]
        %v317 = vld [vmem:[#allocation5 + $0xc0] sm:$0xff]
        %v318 = vld [vmem:[#allocation5 + $0xc8] sm:$0xff]
        %v319 = vld [vmem:[#allocation5 + $0xd0] sm:$0xff]
        %v320 = vld [vmem:[#allocation5 + $0xd8] sm:$0xff]
        %v321 = vld [vmem:[#allocation5 + $0xe0] sm:$0xff]
        %v322 = vld [vmem:[#allocation5 + $0xe8] sm:$0xff]
        %v323 = vld [vmem:[#allocation5 + $0xf0] sm:$0xff]
        %v324 = vld [vmem:[#allocation5 + $0xf8] sm:$0xff]
        %v325 = vld [vmem:[#allocation5 + $0x100] sm:$0xff]
        %v326 = vld [vmem:[#allocation5 + $0x108] sm:$0xff]
        %v327 = vld [vmem:[#allocation5 + $0x110] sm:$0xff]
        %v328 = vld [vmem:[#allocation5 + $0x118] sm:$0xff]
        %v329 = vld [vmem:[#allocation5 + $0x120] sm:$0xff]
        %v330 = vld [vmem:[#allocation5 + $0x128] sm:$0xff]
        %v331 = vld [vmem:[#allocation5 + $0x130] sm:$0xff]
        %v332 = vld [vmem:[#allocation5 + $0x138] sm:$0xff]
        %v333 = vld [vmem:[#allocation5 + $0x140] sm:$0xff]
        %v334 = vld [vmem:[#allocation5 + $0x148] sm:$0xff]
        %v335 = vld [vmem:[#allocation5 + $0x150] sm:$0xff]
        %v336 = vld [vmem:[#allocation5 + $0x158] sm:$0xff]
        %v337 = vld [vmem:[#allocation5 + $0x160] sm:$0xff]
        %v338 = vld [vmem:[#allocation5 + $0x168] sm:$0xff]
        %v339 = vld [vmem:[#allocation5 + $0x170] sm:$0xff]
        %v340 = vld [vmem:[#allocation5 + $0x178] sm:$0xff]
        %v341 = vld [vmem:[#allocation5 + $0x180] sm:$0xff]
        %v342 = vld [vmem:[#allocation5 + $0x188] sm:$0xff]
        %v343 = vld [vmem:[#allocation5 + $0x190] sm:$0xff]
        %v344 = vld [vmem:[#allocation5 + $0x198] sm:$0xff]
        %v345 = vld [vmem:[#allocation5 + $0x1a0] sm:$0xff]
        %v346 = vld [vmem:[#allocation5 + $0x1a8] sm:$0xff]
        %v347 = vld [vmem:[#allocation5 + $0x1b0] sm:$0xff]
        %v348 = vld [vmem:[#allocation5 + $0x1b8] sm:$0xff]
        %v349 = vld [vmem:[#allocation5 + $0x1c0] sm:$0xff]
        %v350 = vld [vmem:[#allocation5 + $0x1c8] sm:$0xff]
        %v351 = vld [vmem:[#allocation5 + $0x1d0] sm:$0xff]
        %v352 = vld [vmem:[#allocation5 + $0x1d8] sm:$0xff]
        %v353 = vld [vmem:[#allocation5 + $0x1e0] sm:$0xff]
        %v354 = vld [vmem:[#allocation5 + $0x1e8] sm:$0xff]
        %v355 = vld [vmem:[#allocation5 + $0x1f0] sm:$0xff]
        %v356 = vld [vmem:[#allocation5 + $0x1f8] sm:$0xff]
        %v357 = vld [vmem:[#allocation7] sm:$0xf]
        %v359 = vlaneseq
        %v360 = vshrl.u32 %v359, 7
        %v361 = vsub.s32 0, %v360
        %v362 = vrot.slane %v357, %v361
        %v363 = vlaneseq
        %v364 = vshrl.u32 %v363, 7
        %v365 = vsub.s32 1, %v364
        %v366 = vrot.slane %v357, %v365
        %v367 = vlaneseq
        %v368 = vshrl.u32 %v367, 7
        %v369 = vsub.s32 2, %v368
        %v370 = vrot.slane %v357, %v369
        %v371 = vlaneseq
        %v372 = vshrl.u32 %v371, 7
        %v373 = vsub.s32 3, %v372
        %v374 = vrot.slane %v357, %v373
        %v383 = vunpack.c.l.b16 %v289
        %v384 = vunpack.c.h.b16 %v289
        %v385 = vunpack.c.l.b16 %v290
        %v386 = vunpack.c.h.b16 %v290
        %v387 = vunpack.c.l.b16 %v291
        %v388 = vunpack.c.h.b16 %v291
        %v389 = vunpack.c.l.b16 %v292
        %v390 = vunpack.c.h.b16 %v292
        %v391 = vpack.c.b16 %v385, %v383
        %v392 = vpack.c.b16 %v386, %v384
        %v393 = vpack.c.b16 %v389, %v387
        %v394 = vpack.c.b16 %v390, %v388
        %v463 = vunpack.c.l.b16 %v293
        %v464 = vunpack.c.h.b16 %v293
        %v465 = vunpack.c.l.b16 %v294
        %v466 = vunpack.c.h.b16 %v294
        %v467 = vunpack.c.l.b16 %v295
        %v468 = vunpack.c.h.b16 %v295
        %v469 = vunpack.c.l.b16 %v296
        %v470 = vunpack.c.h.b16 %v296
        %v471 = vunpack.c.l.b16 %v297
        %v472 = vunpack.c.h.b16 %v297
        %v473 = vunpack.c.l.b16 %v298
        %v474 = vunpack.c.h.b16 %v298
        %v475 = vunpack.c.l.b16 %v299
        %v476 = vunpack.c.h.b16 %v299
        %v477 = vunpack.c.l.b16 %v300
        %v478 = vunpack.c.h.b16 %v300
        %v479 = vunpack.c.l.b16 %v301
        %v480 = vunpack.c.h.b16 %v301
        %v481 = vunpack.c.l.b16 %v302
        %v482 = vunpack.c.h.b16 %v302
        %v483 = vunpack.c.l.b16 %v303
        %v484 = vunpack.c.h.b16 %v303
        %v485 = vunpack.c.l.b16 %v304
        %v486 = vunpack.c.h.b16 %v304
        %v487 = vunpack.c.l.b16 %v305
        %v488 = vunpack.c.h.b16 %v305
        %v489 = vunpack.c.l.b16 %v306
        %v490 = vunpack.c.h.b16 %v306
        %v491 = vunpack.c.l.b16 %v307
        %v492 = vunpack.c.h.b16 %v307
        %v493 = vunpack.c.l.b16 %v308
        %v494 = vunpack.c.h.b16 %v308
        %v495 = vunpack.c.l.b16 %v309
        %v496 = vunpack.c.h.b16 %v309
        %v497 = vunpack.c.l.b16 %v310
        %v498 = vunpack.c.h.b16 %v310
        %v499 = vunpack.c.l.b16 %v311
        %v500 = vunpack.c.h.b16 %v311
        %v501 = vunpack.c.l.b16 %v312
        %v502 = vunpack.c.h.b16 %v312
        %v503 = vunpack.c.l.b16 %v313
        %v504 = vunpack.c.h.b16 %v313
        %v505 = vunpack.c.l.b16 %v314
        %v506 = vunpack.c.h.b16 %v314
        %v507 = vunpack.c.l.b16 %v315
        %v508 = vunpack.c.h.b16 %v315
        %v509 = vunpack.c.l.b16 %v316
        %v510 = vunpack.c.h.b16 %v316
        %v511 = vunpack.c.l.b16 %v317
        %v512 = vunpack.c.h.b16 %v317
        %v513 = vunpack.c.l.b16 %v318
        %v514 = vunpack.c.h.b16 %v318
        %v515 = vunpack.c.l.b16 %v319
        %v516 = vunpack.c.h.b16 %v319
        %v517 = vunpack.c.l.b16 %v320
        %v518 = vunpack.c.h.b16 %v320
        %v519 = vunpack.c.l.b16 %v321
        %v520 = vunpack.c.h.b16 %v321
        %v521 = vunpack.c.l.b16 %v322
        %v522 = vunpack.c.h.b16 %v322
        %v523 = vunpack.c.l.b16 %v323
        %v524 = vunpack.c.h.b16 %v323
        %v525 = vunpack.c.l.b16 %v324
        %v526 = vunpack.c.h.b16 %v324
        %v527 = vunpack.c.l.b16 %v325
        %v528 = vunpack.c.h.b16 %v325
        %v529 = vunpack.c.l.b16 %v326
        %v530 = vunpack.c.h.b16 %v326
        %v531 = vunpack.c.l.b16 %v327
        %v532 = vunpack.c.h.b16 %v327
        %v533 = vunpack.c.l.b16 %v328
        %v534 = vunpack.c.h.b16 %v328
        %v535 = vunpack.c.l.b16 %v329
        %v536 = vunpack.c.h.b16 %v329
        %v537 = vunpack.c.l.b16 %v330
        %v538 = vunpack.c.h.b16 %v330
        %v539 = vunpack.c.l.b16 %v331
        %v540 = vunpack.c.h.b16 %v331
        %v541 = vunpack.c.l.b16 %v332
        %v542 = vunpack.c.h.b16 %v332
        %v543 = vunpack.c.l.b16 %v333
        %v544 = vunpack.c.h.b16 %v333
        %v545 = vunpack.c.l.b16 %v334
        %v546 = vunpack.c.h.b16 %v334
        %v547 = vunpack.c.l.b16 %v335
        %v548 = vunpack.c.h.b16 %v335
        %v549 = vunpack.c.l.b16 %v336
        %v550 = vunpack.c.h.b16 %v336
        %v551 = vunpack.c.l.b16 %v337
        %v552 = vunpack.c.h.b16 %v337
        %v553 = vunpack.c.l.b16 %v338
        %v554 = vunpack.c.h.b16 %v338
        %v555 = vunpack.c.l.b16 %v339
        %v556 = vunpack.c.h.b16 %v339
        %v557 = vunpack.c.l.b16 %v340
        %v558 = vunpack.c.h.b16 %v340
        %v559 = vunpack.c.l.b16 %v341
        %v560 = vunpack.c.h.b16 %v341
        %v561 = vunpack.c.l.b16 %v342
        %v562 = vunpack.c.h.b16 %v342
        %v563 = vunpack.c.l.b16 %v343
        %v564 = vunpack.c.h.b16 %v343
        %v565 = vunpack.c.l.b16 %v344
        %v566 = vunpack.c.h.b16 %v344
        %v567 = vunpack.c.l.b16 %v345
        %v568 = vunpack.c.h.b16 %v345
        %v569 = vunpack.c.l.b16 %v346
        %v570 = vunpack.c.h.b16 %v346
        %v571 = vunpack.c.l.b16 %v347
        %v572 = vunpack.c.h.b16 %v347
        %v573 = vunpack.c.l.b16 %v348
        %v574 = vunpack.c.h.b16 %v348
        %v575 = vunpack.c.l.b16 %v349
        %v576 = vunpack.c.h.b16 %v349
        %v577 = vunpack.c.l.b16 %v350
        %v578 = vunpack.c.h.b16 %v350
        %v579 = vunpack.c.l.b16 %v351
        %v580 = vunpack.c.h.b16 %v351
        %v581 = vunpack.c.l.b16 %v352
        %v582 = vunpack.c.h.b16 %v352
        %v583 = vunpack.c.l.b16 %v353
        %v584 = vunpack.c.h.b16 %v353
        %v585 = vunpack.c.l.b16 %v354
        %v586 = vunpack.c.h.b16 %v354
        %v587 = vunpack.c.l.b16 %v355
        %v588 = vunpack.c.h.b16 %v355
        %v589 = vunpack.c.l.b16 %v356
        %v590 = vunpack.c.h.b16 %v356
        %v591 = vpack.c.b16 %v467, %v463
        %v592 = vpack.c.b16 %v468, %v464
        %v593 = vpack.c.b16 %v469, %v465
        %v594 = vpack.c.b16 %v470, %v466
        %v595 = vpack.c.b16 %v475, %v471
        %v596 = vpack.c.b16 %v476, %v472
        %v597 = vpack.c.b16 %v477, %v473
        %v598 = vpack.c.b16 %v478, %v474
        %v599 = vpack.c.b16 %v483, %v479
        %v600 = vpack.c.b16 %v484, %v480
        %v601 = vpack.c.b16 %v485, %v481
        %v602 = vpack.c.b16 %v486, %v482
        %v603 = vpack.c.b16 %v491, %v487
        %v604 = vpack.c.b16 %v492, %v488
        %v605 = vpack.c.b16 %v493, %v489
        %v606 = vpack.c.b16 %v494, %v490
        %v607 = vpack.c.b16 %v499, %v495
        %v608 = vpack.c.b16 %v500, %v496
        %v609 = vpack.c.b16 %v501, %v497
        %v610 = vpack.c.b16 %v502, %v498
        %v611 = vpack.c.b16 %v507, %v503
        %v612 = vpack.c.b16 %v508, %v504
        %v613 = vpack.c.b16 %v509, %v505
        %v614 = vpack.c.b16 %v510, %v506
        %v615 = vpack.c.b16 %v515, %v511
        %v616 = vpack.c.b16 %v516, %v512
        %v617 = vpack.c.b16 %v517, %v513
        %v618 = vpack.c.b16 %v518, %v514
        %v619 = vpack.c.b16 %v523, %v519
        %v620 = vpack.c.b16 %v524, %v520
        %v621 = vpack.c.b16 %v525, %v521
        %v622 = vpack.c.b16 %v526, %v522
        %v623 = vpack.c.b16 %v531, %v527
        %v624 = vpack.c.b16 %v532, %v528
        %v625 = vpack.c.b16 %v533, %v529
        %v626 = vpack.c.b16 %v534, %v530
        %v627 = vpack.c.b16 %v539, %v535
        %v628 = vpack.c.b16 %v540, %v536
        %v629 = vpack.c.b16 %v541, %v537
        %v630 = vpack.c.b16 %v542, %v538
        %v631 = vpack.c.b16 %v547, %v543
        %v632 = vpack.c.b16 %v548, %v544
        %v633 = vpack.c.b16 %v549, %v545
        %v634 = vpack.c.b16 %v550, %v546
        %v635 = vpack.c.b16 %v555, %v551
        %v636 = vpack.c.b16 %v556, %v552
        %v637 = vpack.c.b16 %v557, %v553
        %v638 = vpack.c.b16 %v558, %v554
        %v639 = vpack.c.b16 %v563, %v559
        %v640 = vpack.c.b16 %v564, %v560
        %v641 = vpack.c.b16 %v565, %v561
        %v642 = vpack.c.b16 %v566, %v562
        %v643 = vpack.c.b16 %v571, %v567
        %v644 = vpack.c.b16 %v572, %v568
        %v645 = vpack.c.b16 %v573, %v569
        %v646 = vpack.c.b16 %v574, %v570
        %v647 = vpack.c.b16 %v579, %v575
        %v648 = vpack.c.b16 %v580, %v576
        %v649 = vpack.c.b16 %v581, %v577
        %v650 = vpack.c.b16 %v582, %v578
        %v651 = vpack.c.b16 %v587, %v583
        %v652 = vpack.c.b16 %v588, %v584
        %v653 = vpack.c.b16 %v589, %v585
        %v654 = vpack.c.b16 %v590, %v586
        %719 = vmatprep.subr.bf16.mxu0 %v620
        %720 = vmatpush1.bf16.msra.mxu0 %v619
        %721 = vmatprep.subr.bf16.mxu0 %v616
        %722 = vmatpush1.bf16.msra.mxu0 %v615
        %723 = vmatprep.subr.bf16.mxu0 %v612
        %724 = vmatpush1.bf16.msra.mxu0 %v611
        %725 = vmatprep.subr.bf16.mxu0 %v608
        %726 = vmatpush1.bf16.msra.mxu0 %v607
        %727 = vmatprep.subr.bf16.mxu0 %v604
        %728 = vmatpush1.bf16.msra.mxu0 %v603
        %729 = vmatprep.subr.bf16.mxu0 %v600
        %730 = vmatpush1.bf16.msra.mxu0 %v599
        %731 = vmatprep.subr.bf16.mxu0 %v596
        %732 = vmatpush1.bf16.msra.mxu0 %v595
        %733 = vmatprep.subr.bf16.mxu0 %v592
        %734 = vmatpush1.bf16.msra.mxu0 %v591
        %735 = vmatprep.subr.bf16.mxu0 %v652
        %736 = vmatpush2.bf16.msra.mxu0 %v651
        %737 = vmatprep.subr.bf16.mxu0 %v648
        %738 = vmatpush2.bf16.msra.mxu0 %v647
        %739 = vmatprep.subr.bf16.mxu0 %v644
        %740 = vmatpush2.bf16.msra.mxu0 %v643
        %741 = vmatprep.subr.bf16.mxu0 %v640
        %742 = vmatpush2.bf16.msra.mxu0 %v639
        %743 = vmatprep.subr.bf16.mxu0 %v636
        %744 = vmatpush2.bf16.msra.mxu0 %v635
        %745 = vmatprep.subr.bf16.mxu0 %v632
        %746 = vmatpush2.bf16.msra.mxu0 %v631
        %747 = vmatprep.subr.bf16.mxu0 %v628
        %748 = vmatpush2.bf16.msra.mxu0 %v627
        %749 = vmatprep.subr.bf16.mxu0 %v624
        %750 = vmatpush2.bf16.msra.mxu0 %v623
        %751 = vmatprep.mubr.bf16.mxu0 %v392
        %752 = vmatmul.mubr.bf16.gmra.mxu0 %v391
        %v753 = vpop.f32.mrf.mxu0
        %v754 = vadd.f32 %v362, %v753
        %v755 = vpop.f32.mrf.mxu0
        %v756 = vadd.f32 %v366, %v755
        %v757 = vpop.f32.mrf.mxu0
        %v758 = vadd.f32 %v362, %v757
        %v759 = vpop.f32.mrf.mxu0
        %v760 = vadd.f32 %v366, %v759
        %761 = vmatprep.mubr.bf16.mxu0 %v394
        %762 = vmatmul.mubr.bf16.gmra.mxu0 %v393
        %v763 = vpop.f32.mrf.mxu0
        %v764 = vadd.f32 %v362, %v763
        %v765 = vpop.f32.mrf.mxu0
        %v766 = vadd.f32 %v366, %v765
        %v767 = vpop.f32.mrf.mxu0
        %v768 = vadd.f32 %v362, %v767
        %v769 = vpop.f32.mrf.mxu0
        %v770 = vadd.f32 %v366, %v769
        %771 = vdwg.mxu0
        %772 = vmatprep.subr.bf16.mxu0 %v622
        %773 = vmatpush1.bf16.msra.mxu0 %v621
        %774 = vmatprep.subr.bf16.mxu0 %v618
        %775 = vmatpush1.bf16.msra.mxu0 %v617
        %776 = vmatprep.subr.bf16.mxu0 %v614
        %777 = vmatpush1.bf16.msra.mxu0 %v613
        %778 = vmatprep.subr.bf16.mxu0 %v610
        %779 = vmatpush1.bf16.msra.mxu0 %v609
        %780 = vmatprep.subr.bf16.mxu0 %v606
        %781 = vmatpush1.bf16.msra.mxu0 %v605
        %782 = vmatprep.subr.bf16.mxu0 %v602
        %783 = vmatpush1.bf16.msra.mxu0 %v601
        %784 = vmatprep.subr.bf16.mxu0 %v598
        %785 = vmatpush1.bf16.msra.mxu0 %v597
        %786 = vmatprep.subr.bf16.mxu0 %v594
        %787 = vmatpush1.bf16.msra.mxu0 %v593
        %788 = vmatprep.subr.bf16.mxu0 %v654
        %789 = vmatpush2.bf16.msra.mxu0 %v653
        %790 = vmatprep.subr.bf16.mxu0 %v650
        %791 = vmatpush2.bf16.msra.mxu0 %v649
        %792 = vmatprep.subr.bf16.mxu0 %v646
        %793 = vmatpush2.bf16.msra.mxu0 %v645
        %794 = vmatprep.subr.bf16.mxu0 %v642
        %795 = vmatpush2.bf16.msra.mxu0 %v641
        %796 = vmatprep.subr.bf16.mxu0 %v638
        %797 = vmatpush2.bf16.msra.mxu0 %v637
        %798 = vmatprep.subr.bf16.mxu0 %v634
        %799 = vmatpush2.bf16.msra.mxu0 %v633
        %800 = vmatprep.subr.bf16.mxu0 %v630
        %801 = vmatpush2.bf16.msra.mxu0 %v629
        %802 = vmatprep.subr.bf16.mxu0 %v626
        %803 = vmatpush2.bf16.msra.mxu0 %v625
        %804 = vmatprep.mubr.bf16.mxu0 %v392
        %805 = vmatmul.mubr.bf16.gmra.mxu0 %v391
        %v806 = vpop.f32.mrf.mxu0
        %v807 = vadd.f32 %v370, %v806
        %v808 = vpop.f32.mrf.mxu0
        %v809 = vadd.f32 %v374, %v808
        %v810 = vpop.f32.mrf.mxu0
        %v811 = vadd.f32 %v370, %v810
        %v812 = vpop.f32.mrf.mxu0
        %v813 = vadd.f32 %v374, %v812
        %814 = vmatprep.mubr.bf16.mxu0 %v394
        %815 = vmatmul.mubr.bf16.gmra.mxu0 %v393
        %v816 = vpop.f32.mrf.mxu0
        %v817 = vadd.f32 %v370, %v816
        %v818 = vpop.f32.mrf.mxu0
        %v819 = vadd.f32 %v374, %v818
        %v820 = vpop.f32.mrf.mxu0
        %v821 = vadd.f32 %v370, %v820
        %v822 = vpop.f32.mrf.mxu0
        %v823 = vadd.f32 %v374, %v822
        %824 = vdwg.mxu0
        %v825 = vmax.f32 %v754, 0.0
        %v826 = vmax.f32 %v756, 0.0
        %v827 = vmax.f32 %v807, 0.0
        %v828 = vmax.f32 %v809, 0.0
        %v829 = vmax.f32 %v758, 0.0
        %v830 = vmax.f32 %v760, 0.0
        %v831 = vmax.f32 %v811, 0.0
        %v832 = vmax.f32 %v813, 0.0
        %v833 = vmax.f32 %v764, 0.0
        %v834 = vmax.f32 %v766, 0.0
        %v835 = vmax.f32 %v817, 0.0
        %v836 = vmax.f32 %v819, 0.0
        %v837 = vmax.f32 %v768, 0.0
        %v838 = vmax.f32 %v770, 0.0
        %v839 = vmax.f32 %v821, 0.0
        %v840 = vmax.f32 %v823, 0.0
        %v841 = vpack.c.bf16 %v829, %v825
        %v842 = vpack.c.bf16 %v830, %v826
        %v843 = vpack.c.bf16 %v831, %v827
        %v844 = vpack.c.bf16 %v832, %v828
        %v845 = vpack.c.bf16 %v837, %v833
        %v846 = vpack.c.bf16 %v838, %v834
        %v847 = vpack.c.bf16 %v839, %v835
        %v848 = vpack.c.bf16 %v840, %v836
        %v849 = vld [vmem:[#allocation8] sm:$0xf]
        %v850 = vld [vmem:[#allocation8 + $0x4] sm:$0xf]
        %v851 = vld [vmem:[#allocation8 + $0x8] sm:$0xf]
        %v852 = vld [vmem:[#allocation8 + $0xc] sm:$0xf]
        %v853 = vld [vmem:[#allocation8 + $0x10] sm:$0xf]
        %v854 = vld [vmem:[#allocation8 + $0x14] sm:$0xf]
        %v855 = vld [vmem:[#allocation8 + $0x18] sm:$0xf]
        %v856 = vld [vmem:[#allocation8 + $0x1c] sm:$0xf]
        %v857 = vld [vmem:[#allocation8 + $0x20] sm:$0xf]
        %v858 = vld [vmem:[#allocation8 + $0x24] sm:$0xf]
        %v859 = vld [vmem:[#allocation8 + $0x28] sm:$0xf]
        %v860 = vld [vmem:[#allocation8 + $0x2c] sm:$0xf]
        %v861 = vld [vmem:[#allocation8 + $0x30] sm:$0xf]
        %v862 = vld [vmem:[#allocation8 + $0x34] sm:$0xf]
        %v863 = vld [vmem:[#allocation8 + $0x38] sm:$0xf]
        %v864 = vld [vmem:[#allocation8 + $0x3c] sm:$0xf]
        %v865 = vld [vmem:[#allocation8 + $0x40] sm:$0xf]
        %v866 = vld [vmem:[#allocation8 + $0x44] sm:$0xf]
        %v867 = vld [vmem:[#allocation8 + $0x48] sm:$0xf]
        %v868 = vld [vmem:[#allocation8 + $0x4c] sm:$0xf]
        %v869 = vld [vmem:[#allocation8 + $0x50] sm:$0xf]
        %v870 = vld [vmem:[#allocation8 + $0x54] sm:$0xf]
        %v871 = vld [vmem:[#allocation8 + $0x58] sm:$0xf]
        %v872 = vld [vmem:[#allocation8 + $0x5c] sm:$0xf]
        %v873 = vld [vmem:[#allocation8 + $0x60] sm:$0xf]
        %v874 = vld [vmem:[#allocation8 + $0x64] sm:$0xf]
        %v875 = vld [vmem:[#allocation8 + $0x68] sm:$0xf]
        %v876 = vld [vmem:[#allocation8 + $0x6c] sm:$0xf]
        %v877 = vld [vmem:[#allocation8 + $0x70] sm:$0xf]
        %v878 = vld [vmem:[#allocation8 + $0x74] sm:$0xf]
        %v879 = vld [vmem:[#allocation8 + $0x78] sm:$0xf]
        %v880 = vld [vmem:[#allocation8 + $0x7c] sm:$0xf]
        %v881 = vld [vmem:[#allocation8 + $0x80] sm:$0xf]
        %v882 = vld [vmem:[#allocation8 + $0x84] sm:$0xf]
        %v883 = vld [vmem:[#allocation8 + $0x88] sm:$0xf]
        %v884 = vld [vmem:[#allocation8 + $0x8c] sm:$0xf]
        %v885 = vld [vmem:[#allocation8 + $0x90] sm:$0xf]
        %v886 = vld [vmem:[#allocation8 + $0x94] sm:$0xf]
        %v887 = vld [vmem:[#allocation8 + $0x98] sm:$0xf]
        %v888 = vld [vmem:[#allocation8 + $0x9c] sm:$0xf]
        %v889 = vld [vmem:[#allocation8 + $0xa0] sm:$0xf]
        %v890 = vld [vmem:[#allocation8 + $0xa4] sm:$0xf]
        %v891 = vld [vmem:[#allocation8 + $0xa8] sm:$0xf]
        %v892 = vld [vmem:[#allocation8 + $0xac] sm:$0xf]
        %v893 = vld [vmem:[#allocation8 + $0xb0] sm:$0xf]
        %v894 = vld [vmem:[#allocation8 + $0xb4] sm:$0xf]
        %v895 = vld [vmem:[#allocation8 + $0xb8] sm:$0xf]
        %v896 = vld [vmem:[#allocation8 + $0xbc] sm:$0xf]
        %v897 = vld [vmem:[#allocation8 + $0xc0] sm:$0xf]
        %v898 = vld [vmem:[#allocation8 + $0xc4] sm:$0xf]
        %v899 = vld [vmem:[#allocation8 + $0xc8] sm:$0xf]
        %v900 = vld [vmem:[#allocation8 + $0xcc] sm:$0xf]
        %v901 = vld [vmem:[#allocation8 + $0xd0] sm:$0xf]
        %v902 = vld [vmem:[#allocation8 + $0xd4] sm:$0xf]
        %v903 = vld [vmem:[#allocation8 + $0xd8] sm:$0xf]
        %v904 = vld [vmem:[#allocation8 + $0xdc] sm:$0xf]
        %v905 = vld [vmem:[#allocation8 + $0xe0] sm:$0xf]
        %v906 = vld [vmem:[#allocation8 + $0xe4] sm:$0xf]
        %v907 = vld [vmem:[#allocation8 + $0xe8] sm:$0xf]
        %v908 = vld [vmem:[#allocation8 + $0xec] sm:$0xf]
        %v909 = vld [vmem:[#allocation8 + $0xf0] sm:$0xf]
        %v910 = vld [vmem:[#allocation8 + $0xf4] sm:$0xf]
        %v911 = vld [vmem:[#allocation8 + $0xf8] sm:$0xf]
        %v912 = vld [vmem:[#allocation8 + $0xfc] sm:$0xf]
        %v913 = vld [vmem:[%s4] sm:$0x1]
        %v915 = vlaneseq
        %v916 = vshrl.u32 %v915, 7
        %v917 = vsub.s32 0, %v916
        %v918 = vrot.slane %v913, %v917
        %v984 = vunpack.c.l.b16 %v849
        %v985 = vunpack.c.l.b16 %v850
        %v986 = vunpack.c.l.b16 %v851
        %v987 = vunpack.c.l.b16 %v852
        %v988 = vunpack.c.l.b16 %v853
        %v989 = vunpack.c.l.b16 %v854
        %v990 = vunpack.c.l.b16 %v855
        %v991 = vunpack.c.l.b16 %v856
        %v992 = vunpack.c.l.b16 %v857
        %v993 = vunpack.c.l.b16 %v858
        %v994 = vunpack.c.l.b16 %v859
        %v995 = vunpack.c.l.b16 %v860
        %v996 = vunpack.c.l.b16 %v861
        %v997 = vunpack.c.l.b16 %v862
        %v998 = vunpack.c.l.b16 %v863
        %v999 = vunpack.c.l.b16 %v864
        %v1000 = vunpack.c.l.b16 %v865
        %v1001 = vunpack.c.l.b16 %v866
        %v1002 = vunpack.c.l.b16 %v867
        %v1003 = vunpack.c.l.b16 %v868
        %v1004 = vunpack.c.l.b16 %v869
        %v1005 = vunpack.c.l.b16 %v870
        %v1006 = vunpack.c.l.b16 %v871
        %v1007 = vunpack.c.l.b16 %v872
        %v1008 = vunpack.c.l.b16 %v873
        %v1009 = vunpack.c.l.b16 %v874
        %v1010 = vunpack.c.l.b16 %v875
        %v1011 = vunpack.c.l.b16 %v876
        %v1012 = vunpack.c.l.b16 %v877
        %v1013 = vunpack.c.l.b16 %v878
        %v1014 = vunpack.c.l.b16 %v879
        %v1015 = vunpack.c.l.b16 %v880
        %v1016 = vunpack.c.l.b16 %v881
        %v1017 = vunpack.c.l.b16 %v882
        %v1018 = vunpack.c.l.b16 %v883
        %v1019 = vunpack.c.l.b16 %v884
        %v1020 = vunpack.c.l.b16 %v885
        %v1021 = vunpack.c.l.b16 %v886
        %v1022 = vunpack.c.l.b16 %v887
        %v1023 = vunpack.c.l.b16 %v888
        %v1024 = vunpack.c.l.b16 %v889
        %v1025 = vunpack.c.l.b16 %v890
        %v1026 = vunpack.c.l.b16 %v891
        %v1027 = vunpack.c.l.b16 %v892
        %v1028 = vunpack.c.l.b16 %v893
        %v1029 = vunpack.c.l.b16 %v894
        %v1030 = vunpack.c.l.b16 %v895
        %v1031 = vunpack.c.l.b16 %v896
        %v1032 = vunpack.c.l.b16 %v897
        %v1033 = vunpack.c.l.b16 %v898
        %v1034 = vunpack.c.l.b16 %v899
        %v1035 = vunpack.c.l.b16 %v900
        %v1036 = vunpack.c.l.b16 %v901
        %v1037 = vunpack.c.l.b16 %v902
        %v1038 = vunpack.c.l.b16 %v903
        %v1039 = vunpack.c.l.b16 %v904
        %v1040 = vunpack.c.l.b16 %v905
        %v1041 = vunpack.c.l.b16 %v906
        %v1042 = vunpack.c.l.b16 %v907
        %v1043 = vunpack.c.l.b16 %v908
        %v1044 = vunpack.c.l.b16 %v909
        %v1045 = vunpack.c.l.b16 %v910
        %v1046 = vunpack.c.l.b16 %v911
        %v1047 = vunpack.c.l.b16 %v912
        %v1048 = vpack.c.b16 %v985, %v984
        %v1049 = vpack.c.b16 %v987, %v986
        %v1050 = vpack.c.b16 %v989, %v988
        %v1051 = vpack.c.b16 %v991, %v990
        %v1052 = vpack.c.b16 %v993, %v992
        %v1053 = vpack.c.b16 %v995, %v994
        %v1054 = vpack.c.b16 %v997, %v996
        %v1055 = vpack.c.b16 %v999, %v998
        %v1056 = vpack.c.b16 %v1001, %v1000
        %v1057 = vpack.c.b16 %v1003, %v1002
        %v1058 = vpack.c.b16 %v1005, %v1004
        %v1059 = vpack.c.b16 %v1007, %v1006
        %v1060 = vpack.c.b16 %v1009, %v1008
        %v1061 = vpack.c.b16 %v1011, %v1010
        %v1062 = vpack.c.b16 %v1013, %v1012
        %v1063 = vpack.c.b16 %v1015, %v1014
        %v1064 = vpack.c.b16 %v1017, %v1016
        %v1065 = vpack.c.b16 %v1019, %v1018
        %v1066 = vpack.c.b16 %v1021, %v1020
        %v1067 = vpack.c.b16 %v1023, %v1022
        %v1068 = vpack.c.b16 %v1025, %v1024
        %v1069 = vpack.c.b16 %v1027, %v1026
        %v1070 = vpack.c.b16 %v1029, %v1028
        %v1071 = vpack.c.b16 %v1031, %v1030
        %v1072 = vpack.c.b16 %v1033, %v1032
        %v1073 = vpack.c.b16 %v1035, %v1034
        %v1074 = vpack.c.b16 %v1037, %v1036
        %v1075 = vpack.c.b16 %v1039, %v1038
        %v1076 = vpack.c.b16 %v1041, %v1040
        %v1077 = vpack.c.b16 %v1043, %v1042
        %v1078 = vpack.c.b16 %v1045, %v1044
        %v1079 = vpack.c.b16 %v1047, %v1046
        %1112 = vmatprep.subr.bf16.mxu0 0
        %1113 = vmatpush1.bf16.msra.mxu0 %v1055
        %1114 = vmatprep.subr.bf16.mxu0 0
        %1115 = vmatpush1.bf16.msra.mxu0 %v1054
        %1116 = vmatprep.subr.bf16.mxu0 0
        %1117 = vmatpush1.bf16.msra.mxu0 %v1053
        %1118 = vmatprep.subr.bf16.mxu0 0
        %1119 = vmatpush1.bf16.msra.mxu0 %v1052
        %1120 = vmatprep.subr.bf16.mxu0 0
        %1121 = vmatpush1.bf16.msra.mxu0 %v1051
        %1122 = vmatprep.subr.bf16.mxu0 0
        %1123 = vmatpush1.bf16.msra.mxu0 %v1050
        %1124 = vmatprep.subr.bf16.mxu0 0
        %1125 = vmatpush1.bf16.msra.mxu0 %v1049
        %1126 = vmatprep.subr.bf16.mxu0 0
        %1127 = vmatpush1.bf16.msra.mxu0 %v1048
        %1128 = vmatprep.subr.bf16.mxu0 0
        %1129 = vmatpush2.bf16.msra.mxu0 %v1063
        %1130 = vmatprep.subr.bf16.mxu0 0
        %1131 = vmatpush2.bf16.msra.mxu0 %v1062
        %1132 = vmatprep.subr.bf16.mxu0 0
        %1133 = vmatpush2.bf16.msra.mxu0 %v1061
        %1134 = vmatprep.subr.bf16.mxu0 0
        %1135 = vmatpush2.bf16.msra.mxu0 %v1060
        %1136 = vmatprep.subr.bf16.mxu0 0
        %1137 = vmatpush2.bf16.msra.mxu0 %v1059
        %1138 = vmatprep.subr.bf16.mxu0 0
        %1139 = vmatpush2.bf16.msra.mxu0 %v1058
        %1140 = vmatprep.subr.bf16.mxu0 0
        %1141 = vmatpush2.bf16.msra.mxu0 %v1057
        %1142 = vmatprep.subr.bf16.mxu0 0
        %1143 = vmatpush2.bf16.msra.mxu0 %v1056
        %1144 = vmatprep.mubr.bf16.mxu0 %v842
        %1145 = vmatmul.mubr.bf16.gmra.mxu0 %v841
        %v1146 = vpop.f32.mrf.mxu0
        %v1147 = vadd.f32 %v918, %v1146
        %v1148 = vpop.f32.mrf.mxu0
        %v1149 = vpop.f32.mrf.mxu0
        %v1150 = vadd.f32 %v918, %v1149
        %v1151 = vpop.f32.mrf.mxu0
        %1152 = vmatprep.mubr.bf16.mxu0 %v846
        %1153 = vmatmul.mubr.bf16.gmra.mxu0 %v845
        %v1154 = vpop.f32.mrf.mxu0
        %v1155 = vadd.f32 %v918, %v1154
        %v1156 = vpop.f32.mrf.mxu0
        %v1157 = vpop.f32.mrf.mxu0
        %v1158 = vadd.f32 %v918, %v1157
        %v1159 = vpop.f32.mrf.mxu0
        %1160 = vdwg.mxu0
        %1161 = vmatprep.subr.bf16.mxu0 0
        %1162 = vmatpush1.bf16.msra.mxu0 %v1071
        %1163 = vmatprep.subr.bf16.mxu0 0
        %1164 = vmatpush1.bf16.msra.mxu0 %v1070
        %1165 = vmatprep.subr.bf16.mxu0 0
        %1166 = vmatpush1.bf16.msra.mxu0 %v1069
        %1167 = vmatprep.subr.bf16.mxu0 0
        %1168 = vmatpush1.bf16.msra.mxu0 %v1068
        %1169 = vmatprep.subr.bf16.mxu0 0
        %1170 = vmatpush1.bf16.msra.mxu0 %v1067
        %1171 = vmatprep.subr.bf16.mxu0 0
        %1172 = vmatpush1.bf16.msra.mxu0 %v1066
        %1173 = vmatprep.subr.bf16.mxu0 0
        %1174 = vmatpush1.bf16.msra.mxu0 %v1065
        %1175 = vmatprep.subr.bf16.mxu0 0
        %1176 = vmatpush1.bf16.msra.mxu0 %v1064
        %1177 = vmatprep.subr.bf16.mxu0 0
        %1178 = vmatpush2.bf16.msra.mxu0 %v1079
        %1179 = vmatprep.subr.bf16.mxu0 0
        %1180 = vmatpush2.bf16.msra.mxu0 %v1078
        %1181 = vmatprep.subr.bf16.mxu0 0
        %1182 = vmatpush2.bf16.msra.mxu0 %v1077
        %1183 = vmatprep.subr.bf16.mxu0 0
        %1184 = vmatpush2.bf16.msra.mxu0 %v1076
        %1185 = vmatprep.subr.bf16.mxu0 0
        %1186 = vmatpush2.bf16.msra.mxu0 %v1075
        %1187 = vmatprep.subr.bf16.mxu0 0
        %1188 = vmatpush2.bf16.msra.mxu0 %v1074
        %1189 = vmatprep.subr.bf16.mxu0 0
        %1190 = vmatpush2.bf16.msra.mxu0 %v1073
        %1191 = vmatprep.subr.bf16.mxu0 0
        %1192 = vmatpush2.bf16.msra.mxu0 %v1072
        %1193 = vmatprep.mubr.bf16.mxu0 %v844
        %1194 = vmatmul.mubr.bf16.gmra.mxu0 %v843
        %v1195 = vpop.f32.mrf.mxu0
        %v1196 = vadd.f32 %v1147, %v1195
        %v1197 = vpop.f32.mrf.mxu0
        %v1198 = vpop.f32.mrf.mxu0
        %v1199 = vadd.f32 %v1150, %v1198
        %v1200 = vpop.f32.mrf.mxu0
        %1201 = vmatprep.mubr.bf16.mxu0 %v848
        %1202 = vmatmul.mubr.bf16.gmra.mxu0 %v847
        %v1203 = vpop.f32.mrf.mxu0
        %v1204 = vadd.f32 %v1155, %v1203
        %v1205 = vpop.f32.mrf.mxu0
        %v1206 = vpop.f32.mrf.mxu0
        %v1207 = vadd.f32 %v1158, %v1206
        %v1208 = vpop.f32.mrf.mxu0
        %1209 = vdwg.mxu0
        %v1210 = vpack.c.bf16 %v1199, %v1196
        %v1211 = vpack.c.bf16 %v1207, %v1204
        %v1214 = vunpack.c.l.b16 %v1210
        %v1215 = vunpack.c.h.b16 %v1210
        %v1216 = vunpack.c.l.b16 %v1211
        %v1217 = vunpack.c.h.b16 %v1211
        %v1218 = vpack.c.b16 %v1214, %v1214
        %v1219 = vpack.c.b16 %v1215, %v1215
        %v1220 = vpack.c.b16 %v1216, %v1216
        %v1221 = vpack.c.b16 %v1217, %v1217
        %1226 = vst [vmem:[%s285] sm:$0xf] %v1218
        %1227 = vst [vmem:[%s285 + $0x4] sm:$0xf] %v1219
        %1228 = vst [vmem:[%s285 + $0x8] sm:$0xf] %v1220
        %1229 = vst [vmem:[%s285 + $0xc] sm:$0xf] %v1221
        %s1230 = sand.u32 %s142, 1
        %s1231 = scalar_lea.sflag [#allocation4], %s1230
        %s1232 = sand.u32 %s142, 1
        %s1233 = smul.addr %s1232, 16
        %s1234 = scalar_lea.vmem [#allocation10], %s1233
        // Predicated region
        $region57: #{projection_head.1} parent=39 // pred_check
          %p1235 = pneg %p152
        $region58: #{projection_head.1} parent=39 // pred_check_branch
          %1237 = sbr.rel (%p1235) target = $region60
        $region59: #{projection_head.1} parent=39 // pred_region
          %s1238 = smul.u32 4, %s24
          %s1240 = ssub.s32 256, 256
          %1241 = vsyncadd %s1231, %s1240
          %s1242 = smul.addr %s1238, 64
          %s1243 = scalar_lea.hbm %s5, %s1242
          %s1244 = sshll.u32 %s1234, 4
          %s1245 = int_to_ptr.vmem [resolvable:$true] %s1244
          %1250 = dma.vmem_to_hbm [thread:$0]  %s1245, 256, %s1243, %s1231, 64, 64, 4
        $region60: #{projection_head.1} parent=39 // pred_fallthru
          _
      $region40: #{projection_head.1} parent=5 // pred_fallthru
        _
      %p1251 = scmp.le.s32.totalorder 2, %s19
      // Predicated region
      $region61: #{projection_head.1} parent=5 // pred_check
        %p1252 = pneg %p1251
      $region62: #{projection_head.1} parent=5 // pred_check_branch
        %1254 = sbr.rel (%p1252) target = $region64
      $region63: #{projection_head.1} parent=5 // pred_region
        %s1255 = ssub.s32 %s19, 2
        // Predicated region
        $region65: #{projection_head.1} parent=63 // pred_check
          %p1256 = pneg %p158
        $region66: #{projection_head.1} parent=63 // pred_check_branch
          %1258 = sbr.rel (%p1256) target = $region68
        $region67: #{projection_head.1} parent=63 // pred_region
          %s1259 = sand.u32 %s143, 1
          %s1260 = scalar_lea.sflag [#allocation4], %s1259
          %s1261 = sand.u32 %s143, 1
          %s1262 = smul.addr %s1261, 16
          %s1263 = scalar_lea.vmem [#allocation10], %s1262
          %1264 = dma.done %s1260, 256
        $region68: #{projection_head.1} parent=63 // pred_fallthru
          _
      $region64: #{projection_head.1} parent=5 // pred_fallthru
        _
    $region6: #{projection_head.1} parent=1 // loop_footer
      %s23 = sadd.s32 1, %s19
    $region7: #{projection_head.1} parent=1 // loop_footer_branch
      %18 = sbr.rel target = $region3
    $region8: #{projection_head.1} parent=1 // loop_exit
      _
    %1265 = vsyncpa [#allocation3], 1
    %s1266 = scalar_lea.sflag [#allocation3], 1
    %1267 = vsyncpa %s1266, 1
    %1268 = vsyncpa [#allocation6], 1
    %1269 = vsyncpa [#allocation9], 1
    %1270 = vsyncpa [#allocation4], 1
    %s1271 = scalar_lea.sflag [#allocation4], 1
    %1272 = vsyncpa %s1271, 1

</llo_original>
